<compile_context>
chip_gen: v7x
topology: tpu7x:2x2x1
jax: 0.10.0
libtpu: 0.0.40
codegen_flags: <defaults>
</compile_context>

<pallas_src>
import functools

import jax
import jax.numpy as jnp
import numpy as np
from jax import lax
from jax.experimental import pallas as pl
from jax.experimental.pallas import tpu as pltpu


_NEG_BIG = -1.0e30  # finite "-inf" stand-in: exp() underflows to 0, no NaN risk


def _softplus(x):
    # stable softplus = max(x, 0) + log1p(exp(-|x|))  (matches torch.nn.Softplus)
    return jnp.maximum(x, 0.0) + jnp.log1p(jnp.exp(-jnp.abs(x)))


def _infonce_kernel(a_ref, b_ref, w2_ref, b2_ref, t0_ref, lse_ref,
                    m_run, s_run, *, n_samples, tile_q, tile_j, hdim, mask_cols):
    it = pl.program_id(0)           # i (y-row / output) tile  -- "parallel"
    jt = pl.program_id(1)           # j (x-column) tile        -- "arbitrary"
    num_j = pl.num_programs(1)

    @pl.when(jt == 0)
    def _init():
        m_run[...] = jnp.full_like(m_run, _NEG_BIG)
        s_run[...] = jnp.zeros_like(s_run)
        t0_ref[...] = jnp.zeros_like(t0_ref)

    # scores[i, j] = sum_h relu(A'[j, h] + B[i, h]) * w2[h] + b2
    # The h-loop (static H, fully unrolled at trace time) keeps everything as
    # lane-dense [TQ, TJ] slabs: the H-reduce is VALU FMAs, not an XLU reduce,
    # and no [TQ, N, H] rank-3 temp is ever materialized.
    scores = jnp.zeros((tile_q, tile_j), dtype=jnp.float32)
    for h in range(hdim):
        a_row = a_ref[h:h + 1, :]                 # [1, TJ] lane vector (A' row h)
        b_col = b_ref[:, h:h + 1]                 # [TQ, 1] (broadcast across lanes)
        scores = scores + jnp.maximum(a_row + b_col, 0.0) * w2_ref[h]
    scores = scores + b2_ref[0]

    if mask_cols:  # only emitted when the j dimension was padded
        col = jt * tile_j + lax.broadcasted_iota(jnp.int32, (tile_q, tile_j), 1)
        scores = jnp.where(col < n_samples, scores, _NEG_BIG)

    # Diagonal term: T0[i] = softplus(scores[i, i]).  Only the j-tile whose
    # column range contains the row's global index contributes (additive, so
    # accumulating jnp.where(diag_here, ..., 0) across j tiles is exact).
    row_g = it * tile_q + lax.broadcasted_iota(jnp.int32, (tile_q, tile_j), 0)
    col_g = jt * tile_j + lax.broadcasted_iota(jnp.int32, (tile_q, tile_j), 1)
    diag_val = jnp.sum(jnp.where(row_g == col_g, scores, 0.0),
                       axis=-1, keepdims=True)                      # [TQ, 1]
    row_idx = it * tile_q + lax.broadcasted_iota(jnp.int32, (tile_q, 1), 0)
    diag_here = (row_idx >= jt * tile_j) & (row_idx < (jt + 1) * tile_j)
    t0_ref[...] += jnp.where(diag_here, _softplus(diag_val), 0.0)

    # Online (flash-style) running max / running sum of exp(raw score) over j.
    # softplus is fused into the LSE: exp(softplus(s)) = 1 + exp(s), so the
    # constant "+1" per VALID column (N of them in total) is added at finalize.
    tile_max = jnp.max(scores, axis=-1, keepdims=True)               # [TQ, 1]
    m_new = jnp.maximum(m_run[...], tile_max)
    s_run[...] = (s_run[...] * jnp.exp(m_run[...] - m_new)
                  + jnp.sum(jnp.exp(scores - m_new), axis=-1, keepdims=True))
    m_run[...] = m_new

    @pl.when(jt == num_j - 1)
    def _finalize():
        m = m_run[...]
        s = s_run[...]
        cap = jnp.maximum(m, 0.0)
        # logsumexp_j softplus(s_ij) = log(N + sum_j exp(s_ij))
        #                            = cap + log(N*exp(-cap) + S*exp(m - cap))
        lse_ref[...] = cap + jnp.log(jnp.float32(n_samples) * jnp.exp(-cap)
                                     + s * jnp.exp(m - cap))


def infonce_loss_pallas(x, y, w1, b1, w2, b2):
    """x, y: [N, D] f32.  w1: [2D, H], b1: [H], w2: [H, 1], b2: [1]."""
    n, d = x.shape
    hdim = b1.shape[0]

    # Hoisted, loop-invariant first-layer matmuls (plain XLA/MXU, outside the
    # kernel).  A' = x @ W1x + b1 (b1 folded in), stored transposed [H, N] so the
    # kernel reads contiguous lane vectors per h.  B = y @ W1y, [N, H].
    prec = lax.Precision.HIGHEST
    a_t = jnp.transpose(jnp.dot(x, w1[:d, :], precision=prec) + b1[None, :])
    b_mat = jnp.dot(y, w1[d:, :], precision=prec)
    a_t = a_t.astype(jnp.float32)
    b_mat = b_mat.astype(jnp.float32)

    # Tile selection: single tile for small/demo N, otherwise sublane-/lane-
    # aligned tiles (TQ multiple of 8, TJ multiple of 128) with padding.
    if n <= 512:
        tile_q, tile_j = n, n
    else:
        tile_q, tile_j = 256, 512
    pad_q = pl.cdiv(n, tile_q) * tile_q
    pad_j = pl.cdiv(n, tile_j) * tile_j
    if pad_q != n:
        b_mat = jnp.pad(b_mat, ((0, pad_q - n), (0, 0)))   # finite zero rows, dropped below
    if pad_j != n:
        a_t = jnp.pad(a_t, ((0, 0), (0, pad_j - n)))       # masked inside the kernel
    num_i = pad_q // tile_q
    num_j = pad_j // tile_j

    kernel = functools.partial(_infonce_kernel, n_samples=n, tile_q=tile_q,
                               tile_j=tile_j, hdim=hdim, mask_cols=(pad_j != n))

    t0, lse = pl.pallas_call(
        kernel,
        out_shape=(jax.ShapeDtypeStruct((pad_q, 1), jnp.float32),
                   jax.ShapeDtypeStruct((pad_q, 1), jnp.float32)),
        grid_spec=pltpu.PrefetchScalarGridSpec(
            num_scalar_prefetch=0,
            grid=(num_i, num_j),
            in_specs=[
                pl.BlockSpec((hdim, tile_j), lambda i, j: (0, j)),   # A'^T  (streamed over j)
                pl.BlockSpec((tile_q, hdim), lambda i, j: (i, 0)),   # B     (resident per i)
                pl.BlockSpec(memory_space=pltpu.MemorySpace.SMEM),   # w2  (H,)
                pl.BlockSpec(memory_space=pltpu.MemorySpace.SMEM),   # b2  (1,)
            ],
            out_specs=[
                pl.BlockSpec((tile_q, 1), lambda i, j: (i, 0)),      # per-row T0
                pl.BlockSpec((tile_q, 1), lambda i, j: (i, 0)),      # per-row LSE
            ],
            scratch_shapes=[
                pltpu.VMEM((tile_q, 1), jnp.float32),   # running max (per i-tile, over j)
                pltpu.VMEM((tile_q, 1), jnp.float32),   # running sum (per i-tile, over j)
            ],
        ),
        compiler_params=pltpu.CompilerParams(
            dimension_semantics=("parallel", "arbitrary"),
            vmem_limit_bytes=48 * 1024 * 1024),
    )(a_t, b_mat, w2.reshape(hdim), b2.reshape(1))

    # Final reduction (mean / -log N) in the wrapper so the i axis stays parallel.
    t0 = t0[:n, 0]
    lse = lse[:n, 0]
    lower = jnp.mean(t0) - (jnp.mean(lse) - jnp.log(jnp.float32(n)))
    return -lower


def infonce_loss_ref(x, y, w1, b1, w2, b2):
    """Pure-JAX reference mirroring the PyTorch forward."""
    n = y.shape[0]
    prec = lax.Precision.HIGHEST

    def F(z):
        hid = jax.nn.relu(jnp.dot(z, w1, precision=prec) + b1)
        return _softplus(jnp.dot(hid, w2, precision=prec) + b2)

    x_tile = jnp.broadcast_to(x[None, :, :], (n, n, x.shape[1]))
    y_tile = jnp.broadcast_to(y[:, None, :], (n, n, y.shape[1]))
    T0 = F(jnp.concatenate([x, y], axis=-1))                 # [N, 1]
    T1 = F(jnp.concatenate([x_tile, y_tile], axis=-1))       # [N, N, 1]
    lse = jax.scipy.special.logsumexp(T1, axis=1)            # [N, 1]
    lower = T0.mean() - (lse.mean() - jnp.log(jnp.float32(n)))
    return -lower


if __name__ == "__main__":
    # emb_dim = 32 -> lstm_hidden = 16; F_func: Linear(64, 32) -> ReLU -> Linear(32, 1) -> Softplus
    emb_dim = 32
    lstm_hidden = emb_dim // 2      # 16
    in_dim = lstm_hidden * 4        # 64  (= 2 * emb_dim, concat of x and y)
    hid_dim = lstm_hidden * 2       # 32
    n_samples = 8

    key = jax.random.PRNGKey(0)
    kx, ky, kw1, kb1, kw2, kb2 = jax.random.split(key, 6)

    x = jax.random.normal(kx, (n_samples, emb_dim), dtype=jnp.float32)
    y = jax.random.normal(ky, (n_samples, emb_dim), dtype=jnp.float32)

    # deterministic synthetic parameters (no checkpoint load)
    w1 = 0.1 * jax.random.normal(kw1, (in_dim, hid_dim), dtype=jnp.float32)
    b1 = 0.1 * jax.random.normal(kb1, (hid_dim,), dtype=jnp.float32)
    w2 = 0.1 * jax.random.normal(kw2, (hid_dim, 1), dtype=jnp.float32)
    b2 = 0.1 * jax.random.normal(kb2, (1,), dtype=jnp.float32)

    loss_kernel = jax.block_until_ready(infonce_loss_pallas(x, y, w1, b1, w2, b2))
    loss_ref = jax.block_until_ready(infonce_loss_ref(x, y, w1, b1, w2, b2))

    np.testing.assert_allclose(np.asarray(loss_kernel), np.asarray(loss_ref),
                               rtol=1e-4, atol=1e-5)
    print("KERNEL_OK")
</pallas_src>

<mosaic_0001>
module attributes {stable_mosaic.version = 11 : i64} {
  func.func @_infonce_kernel(%arg0: i32, %arg1: i32, %arg2: memref<32x8xf32, #tpu.memory_space<vmem>>, %arg3: memref<8x32xf32, #tpu.memory_space<vmem>>, %arg4: memref<32xf32, #tpu.memory_space<smem>>, %arg5: memref<1xf32, #tpu.memory_space<smem>>, %arg6: memref<8x1xf32, #tpu.memory_space<vmem>>, %arg7: memref<8x1xf32, #tpu.memory_space<vmem>>, %arg8: memref<8x1xf32, #tpu.memory_space<vmem>>, %arg9: memref<8x1xf32, #tpu.memory_space<vmem>>) attributes {dimension_semantics = [#tpu.dimension_semantics<parallel>, #tpu.dimension_semantics<arbitrary>], iteration_bounds = array<i64: 1, 1>, scalar_prefetch = 0 : i64, scratch_operands = 2 : i64, tpu.core_type = #tpu.core_type<tc>, window_params = [{transform_indices = @transform_0, window_bounds = array<i64: 32, 8>}, {transform_indices = @transform_1, window_bounds = array<i64: 8, 32>}, {transform_indices = @transform_2, window_bounds = array<i64: 32>}, {transform_indices = @transform_3, window_bounds = array<i64: 1>}, {transform_indices = @transform_4, window_bounds = array<i64: 8, 1>}, {transform_indices = @transform_5, window_bounds = array<i64: 8, 1>}]} {
    %c0_i32 = arith.constant 0 : i32
    %0 = arith.cmpi eq, %arg1, %c0_i32 : i32
    %1 = arith.extui %0 : i1 to i32
    %c0_i32_0 = arith.constant 0 : i32
    %2 = arith.cmpi ne, %1, %c0_i32_0 : i32
    scf.if %2 {
      %cst_189 = arith.constant -1.000000e+30 : f32
      %417 = vector.broadcast %cst_189 : f32 to vector<8x1xf32>
      %c0_190 = arith.constant 0 : index
      %c0_191 = arith.constant 0 : index
      %418 = vector.load %arg8[%c0_190, %c0_191] : memref<8x1xf32, #tpu.memory_space<vmem>>, vector<8x1xf32>
      tpu.vector_store %arg8[%c0_190, %c0_191], %417 {strides = array<i32>} : memref<8x1xf32, #tpu.memory_space<vmem>>, vector<8x1xf32>,
      %cst_192 = arith.constant 0.000000e+00 : f32
      %419 = vector.broadcast %cst_192 : f32 to vector<8x1xf32>
      %c0_193 = arith.constant 0 : index
      %c0_194 = arith.constant 0 : index
      %420 = vector.load %arg9[%c0_193, %c0_194] : memref<8x1xf32, #tpu.memory_space<vmem>>, vector<8x1xf32>
      tpu.vector_store %arg9[%c0_193, %c0_194], %419 {strides = array<i32>} : memref<8x1xf32, #tpu.memory_space<vmem>>, vector<8x1xf32>,
      %cst_195 = arith.constant 0.000000e+00 : f32
      %421 = vector.broadcast %cst_195 : f32 to vector<8x1xf32>
      %c0_196 = arith.constant 0 : index
      %c0_197 = arith.constant 0 : index
      %422 = vector.load %arg6[%c0_196, %c0_197] : memref<8x1xf32, #tpu.memory_space<vmem>>, vector<8x1xf32>
      tpu.vector_store %arg6[%c0_196, %c0_197], %421 {strides = array<i32>} : memref<8x1xf32, #tpu.memory_space<vmem>>, vector<8x1xf32>,
    } else {
    }
    %cst = arith.constant 0.000000e+00 : f32
    %3 = vector.broadcast %cst : f32 to vector<8x8xf32>
    %c0 = arith.constant 0 : index
    %c0_1 = arith.constant 0 : index
    %4 = vector.load %arg2[%c0, %c0_1] : memref<32x8xf32, #tpu.memory_space<vmem>>, vector<1x8xf32>
    %c0_2 = arith.constant 0 : index
    %c0_3 = arith.constant 0 : index
    %5 = vector.load %arg3[%c0_2, %c0_3] : memref<8x32xf32, #tpu.memory_space<vmem>>, vector<8x1xf32>
    %6 = vector.broadcast %4 : vector<1x8xf32> to vector<8x8xf32>
    %7 = vector.broadcast %5 : vector<8x1xf32> to vector<8x8xf32>
    %8 = arith.addf %6, %7 : vector<8x8xf32>
    %cst_4 = arith.constant 0.000000e+00 : f32
    %9 = vector.broadcast %cst_4 : f32 to vector<8x8xf32>
    %10 = arith.maximumf %8, %9 : vector<8x8xf32>
    %c0_5 = arith.constant 0 : index
    %11 = memref.load %arg4[%c0_5] : memref<32xf32, #tpu.memory_space<smem>>
    %12 = vector.broadcast %11 : f32 to vector<8x8xf32>
    %13 = arith.mulf %10, %12 : vector<8x8xf32>
    %14 = arith.addf %3, %13 : vector<8x8xf32>
    %c1 = arith.constant 1 : index
    %c0_6 = arith.constant 0 : index
    %15 = vector.load %arg2[%c1, %c0_6] : memref<32x8xf32, #tpu.memory_space<vmem>>, vector<1x8xf32>
    %c0_7 = arith.constant 0 : index
    %c1_8 = arith.constant 1 : index
    %16 = vector.load %arg3[%c0_7, %c1_8] : memref<8x32xf32, #tpu.memory_space<vmem>>, vector<8x1xf32>
    %17 = vector.broadcast %15 : vector<1x8xf32> to vector<8x8xf32>
    %18 = vector.broadcast %16 : vector<8x1xf32> to vector<8x8xf32>
    %19 = arith.addf %17, %18 : vector<8x8xf32>
    %cst_9 = arith.constant 0.000000e+00 : f32
    %20 = vector.broadcast %cst_9 : f32 to vector<8x8xf32>
    %21 = arith.maximumf %19, %20 : vector<8x8xf32>
    %c1_10 = arith.constant 1 : index
    %22 = memref.load %arg4[%c1_10] : memref<32xf32, #tpu.memory_space<smem>>
    %23 = vector.broadcast %22 : f32 to vector<8x8xf32>
    %24 = arith.mulf %21, %23 : vector<8x8xf32>
    %25 = arith.addf %14, %24 : vector<8x8xf32>
    %c2 = arith.constant 2 : index
    %c0_11 = arith.constant 0 : index
    %26 = vector.load %arg2[%c2, %c0_11] : memref<32x8xf32, #tpu.memory_space<vmem>>, vector<1x8xf32>
    %c0_12 = arith.constant 0 : index
    %c2_13 = arith.constant 2 : index
    %27 = vector.load %arg3[%c0_12, %c2_13] : memref<8x32xf32, #tpu.memory_space<vmem>>, vector<8x1xf32>
    %28 = vector.broadcast %26 : vector<1x8xf32> to vector<8x8xf32>
    %29 = vector.broadcast %27 : vector<8x1xf32> to vector<8x8xf32>
    %30 = arith.addf %28, %29 : vector<8x8xf32>
    %cst_14 = arith.constant 0.000000e+00 : f32
    %31 = vector.broadcast %cst_14 : f32 to vector<8x8xf32>
    %32 = arith.maximumf %30, %31 : vector<8x8xf32>
    %c2_15 = arith.constant 2 : index
    %33 = memref.load %arg4[%c2_15] : memref<32xf32, #tpu.memory_space<smem>>
    %34 = vector.broadcast %33 : f32 to vector<8x8xf32>
    %35 = arith.mulf %32, %34 : vector<8x8xf32>
    %36 = arith.addf %25, %35 : vector<8x8xf32>
    %c3 = arith.constant 3 : index
    %c0_16 = arith.constant 0 : index
    %37 = vector.load %arg2[%c3, %c0_16] : memref<32x8xf32, #tpu.memory_space<vmem>>, vector<1x8xf32>
    %c0_17 = arith.constant 0 : index
    %c3_18 = arith.constant 3 : index
    %38 = vector.load %arg3[%c0_17, %c3_18] : memref<8x32xf32, #tpu.memory_space<vmem>>, vector<8x1xf32>
    %39 = vector.broadcast %37 : vector<1x8xf32> to vector<8x8xf32>
    %40 = vector.broadcast %38 : vector<8x1xf32> to vector<8x8xf32>
    %41 = arith.addf %39, %40 : vector<8x8xf32>
    %cst_19 = arith.constant 0.000000e+00 : f32
    %42 = vector.broadcast %cst_19 : f32 to vector<8x8xf32>
    %43 = arith.maximumf %41, %42 : vector<8x8xf32>
    %c3_20 = arith.constant 3 : index
    %44 = memref.load %arg4[%c3_20] : memref<32xf32, #tpu.memory_space<smem>>
    %45 = vector.broadcast %44 : f32 to vector<8x8xf32>
    %46 = arith.mulf %43, %45 : vector<8x8xf32>
    %47 = arith.addf %36, %46 : vector<8x8xf32>
    %c4 = arith.constant 4 : index
    %c0_21 = arith.constant 0 : index
    %48 = vector.load %arg2[%c4, %c0_21] : memref<32x8xf32, #tpu.memory_space<vmem>>, vector<1x8xf32>
    %c0_22 = arith.constant 0 : index
    %c4_23 = arith.constant 4 : index
    %49 = vector.load %arg3[%c0_22, %c4_23] : memref<8x32xf32, #tpu.memory_space<vmem>>, vector<8x1xf32>
    %50 = vector.broadcast %48 : vector<1x8xf32> to vector<8x8xf32>
    %51 = vector.broadcast %49 : vector<8x1xf32> to vector<8x8xf32>
    %52 = arith.addf %50, %51 : vector<8x8xf32>
    %cst_24 = arith.constant 0.000000e+00 : f32
    %53 = vector.broadcast %cst_24 : f32 to vector<8x8xf32>
    %54 = arith.maximumf %52, %53 : vector<8x8xf32>
    %c4_25 = arith.constant 4 : index
    %55 = memref.load %arg4[%c4_25] : memref<32xf32, #tpu.memory_space<smem>>
    %56 = vector.broadcast %55 : f32 to vector<8x8xf32>
    %57 = arith.mulf %54, %56 : vector<8x8xf32>
    %58 = arith.addf %47, %57 : vector<8x8xf32>
    %c5 = arith.constant 5 : index
    %c0_26 = arith.constant 0 : index
    %59 = vector.load %arg2[%c5, %c0_26] : memref<32x8xf32, #tpu.memory_space<vmem>>, vector<1x8xf32>
    %c0_27 = arith.constant 0 : index
    %c5_28 = arith.constant 5 : index
    %60 = vector.load %arg3[%c0_27, %c5_28] : memref<8x32xf32, #tpu.memory_space<vmem>>, vector<8x1xf32>
    %61 = vector.broadcast %59 : vector<1x8xf32> to vector<8x8xf32>
    %62 = vector.broadcast %60 : vector<8x1xf32> to vector<8x8xf32>
    %63 = arith.addf %61, %62 : vector<8x8xf32>
    %cst_29 = arith.constant 0.000000e+00 : f32
    %64 = vector.broadcast %cst_29 : f32 to vector<8x8xf32>
    %65 = arith.maximumf %63, %64 : vector<8x8xf32>
    %c5_30 = arith.constant 5 : index
    %66 = memref.load %arg4[%c5_30] : memref<32xf32, #tpu.memory_space<smem>>
    %67 = vector.broadcast %66 : f32 to vector<8x8xf32>
    %68 = arith.mulf %65, %67 : vector<8x8xf32>
    %69 = arith.addf %58, %68 : vector<8x8xf32>
    %c6 = arith.constant 6 : index
    %c0_31 = arith.constant 0 : index
    %70 = vector.load %arg2[%c6, %c0_31] : memref<32x8xf32, #tpu.memory_space<vmem>>, vector<1x8xf32>
    %c0_32 = arith.constant 0 : index
    %c6_33 = arith.constant 6 : index
    %71 = vector.load %arg3[%c0_32, %c6_33] : memref<8x32xf32, #tpu.memory_space<vmem>>, vector<8x1xf32>
    %72 = vector.broadcast %70 : vector<1x8xf32> to vector<8x8xf32>
    %73 = vector.broadcast %71 : vector<8x1xf32> to vector<8x8xf32>
    %74 = arith.addf %72, %73 : vector<8x8xf32>
    %cst_34 = arith.constant 0.000000e+00 : f32
    %75 = vector.broadcast %cst_34 : f32 to vector<8x8xf32>
    %76 = arith.maximumf %74, %75 : vector<8x8xf32>
    %c6_35 = arith.constant 6 : index
    %77 = memref.load %arg4[%c6_35] : memref<32xf32, #tpu.memory_space<smem>>
    %78 = vector.broadcast %77 : f32 to vector<8x8xf32>
    %79 = arith.mulf %76, %78 : vector<8x8xf32>
    %80 = arith.addf %69, %79 : vector<8x8xf32>
    %c7 = arith.constant 7 : index
    %c0_36 = arith.constant 0 : index
    %81 = vector.load %arg2[%c7, %c0_36] : memref<32x8xf32, #tpu.memory_space<vmem>>, vector<1x8xf32>
    %c0_37 = arith.constant 0 : index
    %c7_38 = arith.constant 7 : index
    %82 = vector.load %arg3[%c0_37, %c7_38] : memref<8x32xf32, #tpu.memory_space<vmem>>, vector<8x1xf32>
    %83 = vector.broadcast %81 : vector<1x8xf32> to vector<8x8xf32>
    %84 = vector.broadcast %82 : vector<8x1xf32> to vector<8x8xf32>
    %85 = arith.addf %83, %84 : vector<8x8xf32>
    %cst_39 = arith.constant 0.000000e+00 : f32
    %86 = vector.broadcast %cst_39 : f32 to vector<8x8xf32>
    %87 = arith.maximumf %85, %86 : vector<8x8xf32>
    %c7_40 = arith.constant 7 : index
    %88 = memref.load %arg4[%c7_40] : memref<32xf32, #tpu.memory_space<smem>>
    %89 = vector.broadcast %88 : f32 to vector<8x8xf32>
    %90 = arith.mulf %87, %89 : vector<8x8xf32>
    %91 = arith.addf %80, %90 : vector<8x8xf32>
    %c8 = arith.constant 8 : index
    %c0_41 = arith.constant 0 : index
    %92 = vector.load %arg2[%c8, %c0_41] : memref<32x8xf32, #tpu.memory_space<vmem>>, vector<1x8xf32>
    %c0_42 = arith.constant 0 : index
    %c8_43 = arith.constant 8 : index
    %93 = vector.load %arg3[%c0_42, %c8_43] : memref<8x32xf32, #tpu.memory_space<vmem>>, vector<8x1xf32>
    %94 = vector.broadcast %92 : vector<1x8xf32> to vector<8x8xf32>
    %95 = vector.broadcast %93 : vector<8x1xf32> to vector<8x8xf32>
    %96 = arith.addf %94, %95 : vector<8x8xf32>
    %cst_44 = arith.constant 0.000000e+00 : f32
    %97 = vector.broadcast %cst_44 : f32 to vector<8x8xf32>
    %98 = arith.maximumf %96, %97 : vector<8x8xf32>
    %c8_45 = arith.constant 8 : index
    %99 = memref.load %arg4[%c8_45] : memref<32xf32, #tpu.memory_space<smem>>
    %100 = vector.broadcast %99 : f32 to vector<8x8xf32>
    %101 = arith.mulf %98, %100 : vector<8x8xf32>
    %102 = arith.addf %91, %101 : vector<8x8xf32>
    %c9 = arith.constant 9 : index
    %c0_46 = arith.constant 0 : index
    %103 = vector.load %arg2[%c9, %c0_46] : memref<32x8xf32, #tpu.memory_space<vmem>>, vector<1x8xf32>
    %c0_47 = arith.constant 0 : index
    %c9_48 = arith.constant 9 : index
    %104 = vector.load %arg3[%c0_47, %c9_48] : memref<8x32xf32, #tpu.memory_space<vmem>>, vector<8x1xf32>
    %105 = vector.broadcast %103 : vector<1x8xf32> to vector<8x8xf32>
    %106 = vector.broadcast %104 : vector<8x1xf32> to vector<8x8xf32>
    %107 = arith.addf %105, %106 : vector<8x8xf32>
    %cst_49 = arith.constant 0.000000e+00 : f32
    %108 = vector.broadcast %cst_49 : f32 to vector<8x8xf32>
    %109 = arith.maximumf %107, %108 : vector<8x8xf32>
    %c9_50 = arith.constant 9 : index
    %110 = memref.load %arg4[%c9_50] : memref<32xf32, #tpu.memory_space<smem>>
    %111 = vector.broadcast %110 : f32 to vector<8x8xf32>
    %112 = arith.mulf %109, %111 : vector<8x8xf32>
    %113 = arith.addf %102, %112 : vector<8x8xf32>
    %c10 = arith.constant 10 : index
    %c0_51 = arith.constant 0 : index
    %114 = vector.load %arg2[%c10, %c0_51] : memref<32x8xf32, #tpu.memory_space<vmem>>, vector<1x8xf32>
    %c0_52 = arith.constant 0 : index
    %c10_53 = arith.constant 10 : index
    %115 = vector.load %arg3[%c0_52, %c10_53] : memref<8x32xf32, #tpu.memory_space<vmem>>, vector<8x1xf32>
    %116 = vector.broadcast %114 : vector<1x8xf32> to vector<8x8xf32>
    %117 = vector.broadcast %115 : vector<8x1xf32> to vector<8x8xf32>
    %118 = arith.addf %116, %117 : vector<8x8xf32>
    %cst_54 = arith.constant 0.000000e+00 : f32
    %119 = vector.broadcast %cst_54 : f32 to vector<8x8xf32>
    %120 = arith.maximumf %118, %119 : vector<8x8xf32>
    %c10_55 = arith.constant 10 : index
    %121 = memref.load %arg4[%c10_55] : memref<32xf32, #tpu.memory_space<smem>>
    %122 = vector.broadcast %121 : f32 to vector<8x8xf32>
    %123 = arith.mulf %120, %122 : vector<8x8xf32>
    %124 = arith.addf %113, %123 : vector<8x8xf32>
    %c11 = arith.constant 11 : index
    %c0_56 = arith.constant 0 : index
    %125 = vector.load %arg2[%c11, %c0_56] : memref<32x8xf32, #tpu.memory_space<vmem>>, vector<1x8xf32>
    %c0_57 = arith.constant 0 : index
    %c11_58 = arith.constant 11 : index
    %126 = vector.load %arg3[%c0_57, %c11_58] : memref<8x32xf32, #tpu.memory_space<vmem>>, vector<8x1xf32>
    %127 = vector.broadcast %125 : vector<1x8xf32> to vector<8x8xf32>
    %128 = vector.broadcast %126 : vector<8x1xf32> to vector<8x8xf32>
    %129 = arith.addf %127, %128 : vector<8x8xf32>
    %cst_59 = arith.constant 0.000000e+00 : f32
    %130 = vector.broadcast %cst_59 : f32 to vector<8x8xf32>
    %131 = arith.maximumf %129, %130 : vector<8x8xf32>
    %c11_60 = arith.constant 11 : index
    %132 = memref.load %arg4[%c11_60] : memref<32xf32, #tpu.memory_space<smem>>
    %133 = vector.broadcast %132 : f32 to vector<8x8xf32>
    %134 = arith.mulf %131, %133 : vector<8x8xf32>
    %135 = arith.addf %124, %134 : vector<8x8xf32>
    %c12 = arith.constant 12 : index
    %c0_61 = arith.constant 0 : index
    %136 = vector.load %arg2[%c12, %c0_61] : memref<32x8xf32, #tpu.memory_space<vmem>>, vector<1x8xf32>
    %c0_62 = arith.constant 0 : index
    %c12_63 = arith.constant 12 : index
    %137 = vector.load %arg3[%c0_62, %c12_63] : memref<8x32xf32, #tpu.memory_space<vmem>>, vector<8x1xf32>
    %138 = vector.broadcast %136 : vector<1x8xf32> to vector<8x8xf32>
    %139 = vector.broadcast %137 : vector<8x1xf32> to vector<8x8xf32>
    %140 = arith.addf %138, %139 : vector<8x8xf32>
    %cst_64 = arith.constant 0.000000e+00 : f32
    %141 = vector.broadcast %cst_64 : f32 to vector<8x8xf32>
    %142 = arith.maximumf %140, %141 : vector<8x8xf32>
    %c12_65 = arith.constant 12 : index
    %143 = memref.load %arg4[%c12_65] : memref<32xf32, #tpu.memory_space<smem>>
    %144 = vector.broadcast %143 : f32 to vector<8x8xf32>
    %145 = arith.mulf %142, %144 : vector<8x8xf32>
    %146 = arith.addf %135, %145 : vector<8x8xf32>
    %c13 = arith.constant 13 : index
    %c0_66 = arith.constant 0 : index
    %147 = vector.load %arg2[%c13, %c0_66] : memref<32x8xf32, #tpu.memory_space<vmem>>, vector<1x8xf32>
    %c0_67 = arith.constant 0 : index
    %c13_68 = arith.constant 13 : index
    %148 = vector.load %arg3[%c0_67, %c13_68] : memref<8x32xf32, #tpu.memory_space<vmem>>, vector<8x1xf32>
    %149 = vector.broadcast %147 : vector<1x8xf32> to vector<8x8xf32>
    %150 = vector.broadcast %148 : vector<8x1xf32> to vector<8x8xf32>
    %151 = arith.addf %149, %150 : vector<8x8xf32>
    %cst_69 = arith.constant 0.000000e+00 : f32
    %152 = vector.broadcast %cst_69 : f32 to vector<8x8xf32>
    %153 = arith.maximumf %151, %152 : vector<8x8xf32>
    %c13_70 = arith.constant 13 : index
    %154 = memref.load %arg4[%c13_70] : memref<32xf32, #tpu.memory_space<smem>>
    %155 = vector.broadcast %154 : f32 to vector<8x8xf32>
    %156 = arith.mulf %153, %155 : vector<8x8xf32>
    %157 = arith.addf %146, %156 : vector<8x8xf32>
    %c14 = arith.constant 14 : index
    %c0_71 = arith.constant 0 : index
    %158 = vector.load %arg2[%c14, %c0_71] : memref<32x8xf32, #tpu.memory_space<vmem>>, vector<1x8xf32>
    %c0_72 = arith.constant 0 : index
    %c14_73 = arith.constant 14 : index
    %159 = vector.load %arg3[%c0_72, %c14_73] : memref<8x32xf32, #tpu.memory_space<vmem>>, vector<8x1xf32>
    %160 = vector.broadcast %158 : vector<1x8xf32> to vector<8x8xf32>
    %161 = vector.broadcast %159 : vector<8x1xf32> to vector<8x8xf32>
    %162 = arith.addf %160, %161 : vector<8x8xf32>
    %cst_74 = arith.constant 0.000000e+00 : f32
    %163 = vector.broadcast %cst_74 : f32 to vector<8x8xf32>
    %164 = arith.maximumf %162, %163 : vector<8x8xf32>
    %c14_75 = arith.constant 14 : index
    %165 = memref.load %arg4[%c14_75] : memref<32xf32, #tpu.memory_space<smem>>
    %166 = vector.broadcast %165 : f32 to vector<8x8xf32>
    %167 = arith.mulf %164, %166 : vector<8x8xf32>
    %168 = arith.addf %157, %167 : vector<8x8xf32>
    %c15 = arith.constant 15 : index
    %c0_76 = arith.constant 0 : index
    %169 = vector.load %arg2[%c15, %c0_76] : memref<32x8xf32, #tpu.memory_space<vmem>>, vector<1x8xf32>
    %c0_77 = arith.constant 0 : index
    %c15_78 = arith.constant 15 : index
    %170 = vector.load %arg3[%c0_77, %c15_78] : memref<8x32xf32, #tpu.memory_space<vmem>>, vector<8x1xf32>
    %171 = vector.broadcast %169 : vector<1x8xf32> to vector<8x8xf32>
    %172 = vector.broadcast %170 : vector<8x1xf32> to vector<8x8xf32>
    %173 = arith.addf %171, %172 : vector<8x8xf32>
    %cst_79 = arith.constant 0.000000e+00 : f32
    %174 = vector.broadcast %cst_79 : f32 to vector<8x8xf32>
    %175 = arith.maximumf %173, %174 : vector<8x8xf32>
    %c15_80 = arith.constant 15 : index
    %176 = memref.load %arg4[%c15_80] : memref<32xf32, #tpu.memory_space<smem>>
    %177 = vector.broadcast %176 : f32 to vector<8x8xf32>
    %178 = arith.mulf %175, %177 : vector<8x8xf32>
    %179 = arith.addf %168, %178 : vector<8x8xf32>
    %c16 = arith.constant 16 : index
    %c0_81 = arith.constant 0 : index
    %180 = vector.load %arg2[%c16, %c0_81] : memref<32x8xf32, #tpu.memory_space<vmem>>, vector<1x8xf32>
    %c0_82 = arith.constant 0 : index
    %c16_83 = arith.constant 16 : index
    %181 = vector.load %arg3[%c0_82, %c16_83] : memref<8x32xf32, #tpu.memory_space<vmem>>, vector<8x1xf32>
    %182 = vector.broadcast %180 : vector<1x8xf32> to vector<8x8xf32>
    %183 = vector.broadcast %181 : vector<8x1xf32> to vector<8x8xf32>
    %184 = arith.addf %182, %183 : vector<8x8xf32>
    %cst_84 = arith.constant 0.000000e+00 : f32
    %185 = vector.broadcast %cst_84 : f32 to vector<8x8xf32>
    %186 = arith.maximumf %184, %185 : vector<8x8xf32>
    %c16_85 = arith.constant 16 : index
    %187 = memref.load %arg4[%c16_85] : memref<32xf32, #tpu.memory_space<smem>>
    %188 = vector.broadcast %187 : f32 to vector<8x8xf32>
    %189 = arith.mulf %186, %188 : vector<8x8xf32>
    %190 = arith.addf %179, %189 : vector<8x8xf32>
    %c17 = arith.constant 17 : index
    %c0_86 = arith.constant 0 : index
    %191 = vector.load %arg2[%c17, %c0_86] : memref<32x8xf32, #tpu.memory_space<vmem>>, vector<1x8xf32>
    %c0_87 = arith.constant 0 : index
    %c17_88 = arith.constant 17 : index
    %192 = vector.load %arg3[%c0_87, %c17_88] : memref<8x32xf32, #tpu.memory_space<vmem>>, vector<8x1xf32>
    %193 = vector.broadcast %191 : vector<1x8xf32> to vector<8x8xf32>
    %194 = vector.broadcast %192 : vector<8x1xf32> to vector<8x8xf32>
    %195 = arith.addf %193, %194 : vector<8x8xf32>
    %cst_89 = arith.constant 0.000000e+00 : f32
    %196 = vector.broadcast %cst_89 : f32 to vector<8x8xf32>
    %197 = arith.maximumf %195, %196 : vector<8x8xf32>
    %c17_90 = arith.constant 17 : index
    %198 = memref.load %arg4[%c17_90] : memref<32xf32, #tpu.memory_space<smem>>
    %199 = vector.broadcast %198 : f32 to vector<8x8xf32>
    %200 = arith.mulf %197, %199 : vector<8x8xf32>
    %201 = arith.addf %190, %200 : vector<8x8xf32>
    %c18 = arith.constant 18 : index
    %c0_91 = arith.constant 0 : index
    %202 = vector.load %arg2[%c18, %c0_91] : memref<32x8xf32, #tpu.memory_space<vmem>>, vector<1x8xf32>
    %c0_92 = arith.constant 0 : index
    %c18_93 = arith.constant 18 : index
    %203 = vector.load %arg3[%c0_92, %c18_93] : memref<8x32xf32, #tpu.memory_space<vmem>>, vector<8x1xf32>
    %204 = vector.broadcast %202 : vector<1x8xf32> to vector<8x8xf32>
    %205 = vector.broadcast %203 : vector<8x1xf32> to vector<8x8xf32>
    %206 = arith.addf %204, %205 : vector<8x8xf32>
    %cst_94 = arith.constant 0.000000e+00 : f32
    %207 = vector.broadcast %cst_94 : f32 to vector<8x8xf32>
    %208 = arith.maximumf %206, %207 : vector<8x8xf32>
    %c18_95 = arith.constant 18 : index
    %209 = memref.load %arg4[%c18_95] : memref<32xf32, #tpu.memory_space<smem>>
    %210 = vector.broadcast %209 : f32 to vector<8x8xf32>
    %211 = arith.mulf %208, %210 : vector<8x8xf32>
    %212 = arith.addf %201, %211 : vector<8x8xf32>
    %c19 = arith.constant 19 : index
    %c0_96 = arith.constant 0 : index
    %213 = vector.load %arg2[%c19, %c0_96] : memref<32x8xf32, #tpu.memory_space<vmem>>, vector<1x8xf32>
    %c0_97 = arith.constant 0 : index
    %c19_98 = arith.constant 19 : index
    %214 = vector.load %arg3[%c0_97, %c19_98] : memref<8x32xf32, #tpu.memory_space<vmem>>, vector<8x1xf32>
    %215 = vector.broadcast %213 : vector<1x8xf32> to vector<8x8xf32>
    %216 = vector.broadcast %214 : vector<8x1xf32> to vector<8x8xf32>
    %217 = arith.addf %215, %216 : vector<8x8xf32>
    %cst_99 = arith.constant 0.000000e+00 : f32
    %218 = vector.broadcast %cst_99 : f32 to vector<8x8xf32>
    %219 = arith.maximumf %217, %218 : vector<8x8xf32>
    %c19_100 = arith.constant 19 : index
    %220 = memref.load %arg4[%c19_100] : memref<32xf32, #tpu.memory_space<smem>>
    %221 = vector.broadcast %220 : f32 to vector<8x8xf32>
    %222 = arith.mulf %219, %221 : vector<8x8xf32>
    %223 = arith.addf %212, %222 : vector<8x8xf32>
    %c20 = arith.constant 20 : index
    %c0_101 = arith.constant 0 : index
    %224 = vector.load %arg2[%c20, %c0_101] : memref<32x8xf32, #tpu.memory_space<vmem>>, vector<1x8xf32>
    %c0_102 = arith.constant 0 : index
    %c20_103 = arith.constant 20 : index
    %225 = vector.load %arg3[%c0_102, %c20_103] : memref<8x32xf32, #tpu.memory_space<vmem>>, vector<8x1xf32>
    %226 = vector.broadcast %224 : vector<1x8xf32> to vector<8x8xf32>
    %227 = vector.broadcast %225 : vector<8x1xf32> to vector<8x8xf32>
    %228 = arith.addf %226, %227 : vector<8x8xf32>
    %cst_104 = arith.constant 0.000000e+00 : f32
    %229 = vector.broadcast %cst_104 : f32 to vector<8x8xf32>
    %230 = arith.maximumf %228, %229 : vector<8x8xf32>
    %c20_105 = arith.constant 20 : index
    %231 = memref.load %arg4[%c20_105] : memref<32xf32, #tpu.memory_space<smem>>
    %232 = vector.broadcast %231 : f32 to vector<8x8xf32>
    %233 = arith.mulf %230, %232 : vector<8x8xf32>
    %234 = arith.addf %223, %233 : vector<8x8xf32>
    %c21 = arith.constant 21 : index
    %c0_106 = arith.constant 0 : index
    %235 = vector.load %arg2[%c21, %c0_106] : memref<32x8xf32, #tpu.memory_space<vmem>>, vector<1x8xf32>
    %c0_107 = arith.constant 0 : index
    %c21_108 = arith.constant 21 : index
    %236 = vector.load %arg3[%c0_107, %c21_108] : memref<8x32xf32, #tpu.memory_space<vmem>>, vector<8x1xf32>
    %237 = vector.broadcast %235 : vector<1x8xf32> to vector<8x8xf32>
    %238 = vector.broadcast %236 : vector<8x1xf32> to vector<8x8xf32>
    %239 = arith.addf %237, %238 : vector<8x8xf32>
    %cst_109 = arith.constant 0.000000e+00 : f32
    %240 = vector.broadcast %cst_109 : f32 to vector<8x8xf32>
    %241 = arith.maximumf %239, %240 : vector<8x8xf32>
    %c21_110 = arith.constant 21 : index
    %242 = memref.load %arg4[%c21_110] : memref<32xf32, #tpu.memory_space<smem>>
    %243 = vector.broadcast %242 : f32 to vector<8x8xf32>
    %244 = arith.mulf %241, %243 : vector<8x8xf32>
    %245 = arith.addf %234, %244 : vector<8x8xf32>
    %c22 = arith.constant 22 : index
    %c0_111 = arith.constant 0 : index
    %246 = vector.load %arg2[%c22, %c0_111] : memref<32x8xf32, #tpu.memory_space<vmem>>, vector<1x8xf32>
    %c0_112 = arith.constant 0 : index
    %c22_113 = arith.constant 22 : index
    %247 = vector.load %arg3[%c0_112, %c22_113] : memref<8x32xf32, #tpu.memory_space<vmem>>, vector<8x1xf32>
    %248 = vector.broadcast %246 : vector<1x8xf32> to vector<8x8xf32>
    %249 = vector.broadcast %247 : vector<8x1xf32> to vector<8x8xf32>
    %250 = arith.addf %248, %249 : vector<8x8xf32>
    %cst_114 = arith.constant 0.000000e+00 : f32
    %251 = vector.broadcast %cst_114 : f32 to vector<8x8xf32>
    %252 = arith.maximumf %250, %251 : vector<8x8xf32>
    %c22_115 = arith.constant 22 : index
    %253 = memref.load %arg4[%c22_115] : memref<32xf32, #tpu.memory_space<smem>>
    %254 = vector.broadcast %253 : f32 to vector<8x8xf32>
    %255 = arith.mulf %252, %254 : vector<8x8xf32>
    %256 = arith.addf %245, %255 : vector<8x8xf32>
    %c23 = arith.constant 23 : index
    %c0_116 = arith.constant 0 : index
    %257 = vector.load %arg2[%c23, %c0_116] : memref<32x8xf32, #tpu.memory_space<vmem>>, vector<1x8xf32>
    %c0_117 = arith.constant 0 : index
    %c23_118 = arith.constant 23 : index
    %258 = vector.load %arg3[%c0_117, %c23_118] : memref<8x32xf32, #tpu.memory_space<vmem>>, vector<8x1xf32>
    %259 = vector.broadcast %257 : vector<1x8xf32> to vector<8x8xf32>
    %260 = vector.broadcast %258 : vector<8x1xf32> to vector<8x8xf32>
    %261 = arith.addf %259, %260 : vector<8x8xf32>
    %cst_119 = arith.constant 0.000000e+00 : f32
    %262 = vector.broadcast %cst_119 : f32 to vector<8x8xf32>
    %263 = arith.maximumf %261, %262 : vector<8x8xf32>
    %c23_120 = arith.constant 23 : index
    %264 = memref.load %arg4[%c23_120] : memref<32xf32, #tpu.memory_space<smem>>
    %265 = vector.broadcast %264 : f32 to vector<8x8xf32>
    %266 = arith.mulf %263, %265 : vector<8x8xf32>
    %267 = arith.addf %256, %266 : vector<8x8xf32>
    %c24 = arith.constant 24 : index
    %c0_121 = arith.constant 0 : index
    %268 = vector.load %arg2[%c24, %c0_121] : memref<32x8xf32, #tpu.memory_space<vmem>>, vector<1x8xf32>
    %c0_122 = arith.constant 0 : index
    %c24_123 = arith.constant 24 : index
    %269 = vector.load %arg3[%c0_122, %c24_123] : memref<8x32xf32, #tpu.memory_space<vmem>>, vector<8x1xf32>
    %270 = vector.broadcast %268 : vector<1x8xf32> to vector<8x8xf32>
    %271 = vector.broadcast %269 : vector<8x1xf32> to vector<8x8xf32>
    %272 = arith.addf %270, %271 : vector<8x8xf32>
    %cst_124 = arith.constant 0.000000e+00 : f32
    %273 = vector.broadcast %cst_124 : f32 to vector<8x8xf32>
    %274 = arith.maximumf %272, %273 : vector<8x8xf32>
    %c24_125 = arith.constant 24 : index
    %275 = memref.load %arg4[%c24_125] : memref<32xf32, #tpu.memory_space<smem>>
    %276 = vector.broadcast %275 : f32 to vector<8x8xf32>
    %277 = arith.mulf %274, %276 : vector<8x8xf32>
    %278 = arith.addf %267, %277 : vector<8x8xf32>
    %c25 = arith.constant 25 : index
    %c0_126 = arith.constant 0 : index
    %279 = vector.load %arg2[%c25, %c0_126] : memref<32x8xf32, #tpu.memory_space<vmem>>, vector<1x8xf32>
    %c0_127 = arith.constant 0 : index
    %c25_128 = arith.constant 25 : index
    %280 = vector.load %arg3[%c0_127, %c25_128] : memref<8x32xf32, #tpu.memory_space<vmem>>, vector<8x1xf32>
    %281 = vector.broadcast %279 : vector<1x8xf32> to vector<8x8xf32>
    %282 = vector.broadcast %280 : vector<8x1xf32> to vector<8x8xf32>
    %283 = arith.addf %281, %282 : vector<8x8xf32>
    %cst_129 = arith.constant 0.000000e+00 : f32
    %284 = vector.broadcast %cst_129 : f32 to vector<8x8xf32>
    %285 = arith.maximumf %283, %284 : vector<8x8xf32>
    %c25_130 = arith.constant 25 : index
    %286 = memref.load %arg4[%c25_130] : memref<32xf32, #tpu.memory_space<smem>>
    %287 = vector.broadcast %286 : f32 to vector<8x8xf32>
    %288 = arith.mulf %285, %287 : vector<8x8xf32>
    %289 = arith.addf %278, %288 : vector<8x8xf32>
    %c26 = arith.constant 26 : index
    %c0_131 = arith.constant 0 : index
    %290 = vector.load %arg2[%c26, %c0_131] : memref<32x8xf32, #tpu.memory_space<vmem>>, vector<1x8xf32>
    %c0_132 = arith.constant 0 : index
    %c26_133 = arith.constant 26 : index
    %291 = vector.load %arg3[%c0_132, %c26_133] : memref<8x32xf32, #tpu.memory_space<vmem>>, vector<8x1xf32>
    %292 = vector.broadcast %290 : vector<1x8xf32> to vector<8x8xf32>
    %293 = vector.broadcast %291 : vector<8x1xf32> to vector<8x8xf32>
    %294 = arith.addf %292, %293 : vector<8x8xf32>
    %cst_134 = arith.constant 0.000000e+00 : f32
    %295 = vector.broadcast %cst_134 : f32 to vector<8x8xf32>
    %296 = arith.maximumf %294, %295 : vector<8x8xf32>
    %c26_135 = arith.constant 26 : index
    %297 = memref.load %arg4[%c26_135] : memref<32xf32, #tpu.memory_space<smem>>
    %298 = vector.broadcast %297 : f32 to vector<8x8xf32>
    %299 = arith.mulf %296, %298 : vector<8x8xf32>
    %300 = arith.addf %289, %299 : vector<8x8xf32>
    %c27 = arith.constant 27 : index
    %c0_136 = arith.constant 0 : index
    %301 = vector.load %arg2[%c27, %c0_136] : memref<32x8xf32, #tpu.memory_space<vmem>>, vector<1x8xf32>
    %c0_137 = arith.constant 0 : index
    %c27_138 = arith.constant 27 : index
    %302 = vector.load %arg3[%c0_137, %c27_138] : memref<8x32xf32, #tpu.memory_space<vmem>>, vector<8x1xf32>
    %303 = vector.broadcast %301 : vector<1x8xf32> to vector<8x8xf32>
    %304 = vector.broadcast %302 : vector<8x1xf32> to vector<8x8xf32>
    %305 = arith.addf %303, %304 : vector<8x8xf32>
    %cst_139 = arith.constant 0.000000e+00 : f32
    %306 = vector.broadcast %cst_139 : f32 to vector<8x8xf32>
    %307 = arith.maximumf %305, %306 : vector<8x8xf32>
    %c27_140 = arith.constant 27 : index
    %308 = memref.load %arg4[%c27_140] : memref<32xf32, #tpu.memory_space<smem>>
    %309 = vector.broadcast %308 : f32 to vector<8x8xf32>
    %310 = arith.mulf %307, %309 : vector<8x8xf32>
    %311 = arith.addf %300, %310 : vector<8x8xf32>
    %c28 = arith.constant 28 : index
    %c0_141 = arith.constant 0 : index
    %312 = vector.load %arg2[%c28, %c0_141] : memref<32x8xf32, #tpu.memory_space<vmem>>, vector<1x8xf32>
    %c0_142 = arith.constant 0 : index
    %c28_143 = arith.constant 28 : index
    %313 = vector.load %arg3[%c0_142, %c28_143] : memref<8x32xf32, #tpu.memory_space<vmem>>, vector<8x1xf32>
    %314 = vector.broadcast %312 : vector<1x8xf32> to vector<8x8xf32>
    %315 = vector.broadcast %313 : vector<8x1xf32> to vector<8x8xf32>
    %316 = arith.addf %314, %315 : vector<8x8xf32>
    %cst_144 = arith.constant 0.000000e+00 : f32
    %317 = vector.broadcast %cst_144 : f32 to vector<8x8xf32>
    %318 = arith.maximumf %316, %317 : vector<8x8xf32>
    %c28_145 = arith.constant 28 : index
    %319 = memref.load %arg4[%c28_145] : memref<32xf32, #tpu.memory_space<smem>>
    %320 = vector.broadcast %319 : f32 to vector<8x8xf32>
    %321 = arith.mulf %318, %320 : vector<8x8xf32>
    %322 = arith.addf %311, %321 : vector<8x8xf32>
    %c29 = arith.constant 29 : index
    %c0_146 = arith.constant 0 : index
    %323 = vector.load %arg2[%c29, %c0_146] : memref<32x8xf32, #tpu.memory_space<vmem>>, vector<1x8xf32>
    %c0_147 = arith.constant 0 : index
    %c29_148 = arith.constant 29 : index
    %324 = vector.load %arg3[%c0_147, %c29_148] : memref<8x32xf32, #tpu.memory_space<vmem>>, vector<8x1xf32>
    %325 = vector.broadcast %323 : vector<1x8xf32> to vector<8x8xf32>
    %326 = vector.broadcast %324 : vector<8x1xf32> to vector<8x8xf32>
    %327 = arith.addf %325, %326 : vector<8x8xf32>
    %cst_149 = arith.constant 0.000000e+00 : f32
    %328 = vector.broadcast %cst_149 : f32 to vector<8x8xf32>
    %329 = arith.maximumf %327, %328 : vector<8x8xf32>
    %c29_150 = arith.constant 29 : index
    %330 = memref.load %arg4[%c29_150] : memref<32xf32, #tpu.memory_space<smem>>
    %331 = vector.broadcast %330 : f32 to vector<8x8xf32>
    %332 = arith.mulf %329, %331 : vector<8x8xf32>
    %333 = arith.addf %322, %332 : vector<8x8xf32>
    %c30 = arith.constant 30 : index
    %c0_151 = arith.constant 0 : index
    %334 = vector.load %arg2[%c30, %c0_151] : memref<32x8xf32, #tpu.memory_space<vmem>>, vector<1x8xf32>
    %c0_152 = arith.constant 0 : index
    %c30_153 = arith.constant 30 : index
    %335 = vector.load %arg3[%c0_152, %c30_153] : memref<8x32xf32, #tpu.memory_space<vmem>>, vector<8x1xf32>
    %336 = vector.broadcast %334 : vector<1x8xf32> to vector<8x8xf32>
    %337 = vector.broadcast %335 : vector<8x1xf32> to vector<8x8xf32>
    %338 = arith.addf %336, %337 : vector<8x8xf32>
    %cst_154 = arith.constant 0.000000e+00 : f32
    %339 = vector.broadcast %cst_154 : f32 to vector<8x8xf32>
    %340 = arith.maximumf %338, %339 : vector<8x8xf32>
    %c30_155 = arith.constant 30 : index
    %341 = memref.load %arg4[%c30_155] : memref<32xf32, #tpu.memory_space<smem>>
    %342 = vector.broadcast %341 : f32 to vector<8x8xf32>
    %343 = arith.mulf %340, %342 : vector<8x8xf32>
    %344 = arith.addf %333, %343 : vector<8x8xf32>
    %c31 = arith.constant 31 : index
    %c0_156 = arith.constant 0 : index
    %345 = vector.load %arg2[%c31, %c0_156] : memref<32x8xf32, #tpu.memory_space<vmem>>, vector<1x8xf32>
    %c0_157 = arith.constant 0 : index
    %c31_158 = arith.constant 31 : index
    %346 = vector.load %arg3[%c0_157, %c31_158] : memref<8x32xf32, #tpu.memory_space<vmem>>, vector<8x1xf32>
    %347 = vector.broadcast %345 : vector<1x8xf32> to vector<8x8xf32>
    %348 = vector.broadcast %346 : vector<8x1xf32> to vector<8x8xf32>
    %349 = arith.addf %347, %348 : vector<8x8xf32>
    %cst_159 = arith.constant 0.000000e+00 : f32
    %350 = vector.broadcast %cst_159 : f32 to vector<8x8xf32>
    %351 = arith.maximumf %349, %350 : vector<8x8xf32>
    %c31_160 = arith.constant 31 : index
    %352 = memref.load %arg4[%c31_160] : memref<32xf32, #tpu.memory_space<smem>>
    %353 = vector.broadcast %352 : f32 to vector<8x8xf32>
    %354 = arith.mulf %351, %353 : vector<8x8xf32>
    %355 = arith.addf %344, %354 : vector<8x8xf32>
    %c0_161 = arith.constant 0 : index
    %356 = memref.load %arg5[%c0_161] : memref<1xf32, #tpu.memory_space<smem>>
    %357 = vector.broadcast %356 : f32 to vector<8x8xf32>
    %358 = arith.addf %355, %357 : vector<8x8xf32>
    %c8_i32 = arith.constant 8 : i32
    %359 = arith.muli %arg0, %c8_i32 : i32
    %360 = tpu.iota {dimensions = array<i32: 0>} : vector<8x8xi32>
    %361 = vector.broadcast %359 : i32 to vector<8x8xi32>
    %362 = arith.addi %361, %360 : vector<8x8xi32>
    %c8_i32_162 = arith.constant 8 : i32
    %363 = arith.muli %arg1, %c8_i32_162 : i32
    %364 = tpu.iota {dimensions = array<i32: 1>} : vector<8x8xi32>
    %365 = vector.broadcast %363 : i32 to vector<8x8xi32>
    %366 = arith.addi %365, %364 : vector<8x8xi32>
    %367 = arith.cmpi eq, %362, %366 : vector<8x8xi32>
    %cst_163 = arith.constant 0.000000e+00 : f32
    %368 = vector.broadcast %cst_163 : f32 to vector<8x8xf32>
    %369 = arith.select %367, %358, %368 : vector<8x8xi1>, vector<8x8xf32>
    %cst_164 = arith.constant dense<0.000000e+00> : vector<8xf32>
    %370 = vector.multi_reduction <add>, %369, %cst_164 [1] : vector<8x8xf32> to vector<8xf32>
    %371 = vector.shape_cast %370 : vector<8xf32> to vector<8x1xf32>
    %c8_i32_165 = arith.constant 8 : i32
    %372 = arith.muli %arg0, %c8_i32_165 : i32
    %373 = tpu.iota {dimensions = array<i32: 0>} : vector<8x1xi32>
    %374 = vector.broadcast %372 : i32 to vector<8x1xi32>
    %375 = arith.addi %374, %373 : vector<8x1xi32>
    %c8_i32_166 = arith.constant 8 : i32
    %376 = arith.muli %arg1, %c8_i32_166 : i32
    %377 = vector.broadcast %376 : i32 to vector<8x1xi32>
    %378 = arith.cmpi sge, %375, %377 : vector<8x1xi32>
    %c1_i32 = arith.constant 1 : i32
    %379 = arith.addi %arg1, %c1_i32 : i32
    %c8_i32_167 = arith.constant 8 : i32
    %380 = arith.muli %379, %c8_i32_167 : i32
    %381 = vector.broadcast %380 : i32 to vector<8x1xi32>
    %382 = arith.cmpi slt, %375, %381 : vector<8x1xi32>
    %383 = arith.andi %378, %382 : vector<8x1xi1>
    %c0_168 = arith.constant 0 : index
    %c0_169 = arith.constant 0 : index
    %384 = vector.load %arg6[%c0_168, %c0_169] : memref<8x1xf32, #tpu.memory_space<vmem>>, vector<8x1xf32>
    %cst_170 = arith.constant 0.000000e+00 : f32
    %385 = vector.broadcast %cst_170 : f32 to vector<8x1xf32>
    %386 = arith.maximumf %371, %385 : vector<8x1xf32>
    %387 = math.absf %371 : vector<8x1xf32>
    %cst_171 = arith.constant 0.000000e+00 : f32
    %388 = vector.broadcast %cst_171 : f32 to vector<8x1xf32>
    %389 = arith.subf %388, %387 : vector<8x1xf32>
    %390 = math.exp %389 : vector<8x1xf32>
    %391 = math.log1p %390 : vector<8x1xf32>
    %392 = arith.addf %386, %391 : vector<8x1xf32>
    %cst_172 = arith.constant 0.000000e+00 : f32
    %393 = vector.broadcast %cst_172 : f32 to vector<8x1xf32>
    %394 = arith.select %383, %392, %393 : vector<8x1xi1>, vector<8x1xf32>
    %395 = arith.addf %384, %394 : vector<8x1xf32>
    %c0_173 = arith.constant 0 : index
    %c0_174 = arith.constant 0 : index
    %396 = vector.load %arg6[%c0_173, %c0_174] : memref<8x1xf32, #tpu.memory_space<vmem>>, vector<8x1xf32>
    tpu.vector_store %arg6[%c0_173, %c0_174], %395 {strides = array<i32>} : memref<8x1xf32, #tpu.memory_space<vmem>>, vector<8x1xf32>,
    %cst_175 = arith.constant dense<0xFF800000> : vector<8xf32>
    %397 = vector.multi_reduction <maximumf>, %358, %cst_175 [1] : vector<8x8xf32> to vector<8xf32>
    %398 = vector.shape_cast %397 : vector<8xf32> to vector<8x1xf32>
    %c0_176 = arith.constant 0 : index
    %c0_177 = arith.constant 0 : index
    %399 = vector.load %arg8[%c0_176, %c0_177] : memref<8x1xf32, #tpu.memory_space<vmem>>, vector<8x1xf32>
    %400 = arith.maximumf %399, %398 : vector<8x1xf32>
    %c0_178 = arith.constant 0 : index
    %c0_179 = arith.constant 0 : index
    %401 = vector.load %arg9[%c0_178, %c0_179] : memref<8x1xf32, #tpu.memory_space<vmem>>, vector<8x1xf32>
    %c0_180 = arith.constant 0 : index
    %c0_181 = arith.constant 0 : index
    %402 = vector.load %arg8[%c0_180, %c0_181] : memref<8x1xf32, #tpu.memory_space<vmem>>, vector<8x1xf32>
    %403 = arith.subf %402, %400 : vector<8x1xf32>
    %404 = math.exp %403 : vector<8x1xf32>
    %405 = arith.mulf %401, %404 : vector<8x1xf32>
    %406 = vector.broadcast %400 : vector<8x1xf32> to vector<8x8xf32>
    %407 = arith.subf %358, %406 : vector<8x8xf32>
    %408 = math.exp %407 : vector<8x8xf32>
    %cst_182 = arith.constant dense<0.000000e+00> : vector<8xf32>
    %409 = vector.multi_reduction <add>, %408, %cst_182 [1] : vector<8x8xf32> to vector<8xf32>
    %410 = vector.shape_cast %409 : vector<8xf32> to vector<8x1xf32>
    %411 = arith.addf %405, %410 : vector<8x1xf32>
    %c0_183 = arith.constant 0 : index
    %c0_184 = arith.constant 0 : index
    %412 = vector.load %arg9[%c0_183, %c0_184] : memref<8x1xf32, #tpu.memory_space<vmem>>, vector<8x1xf32>
    tpu.vector_store %arg9[%c0_183, %c0_184], %411 {strides = array<i32>} : memref<8x1xf32, #tpu.memory_space<vmem>>, vector<8x1xf32>,
    %c0_185 = arith.constant 0 : index
    %c0_186 = arith.constant 0 : index
    %413 = vector.load %arg8[%c0_185, %c0_186] : memref<8x1xf32, #tpu.memory_space<vmem>>, vector<8x1xf32>
    tpu.vector_store %arg8[%c0_185, %c0_186], %400 {strides = array<i32>} : memref<8x1xf32, #tpu.memory_space<vmem>>, vector<8x1xf32>,
    %c0_i32_187 = arith.constant 0 : i32
    %414 = arith.cmpi eq, %arg1, %c0_i32_187 : i32
    %415 = arith.extui %414 : i1 to i32
    %c0_i32_188 = arith.constant 0 : i32
    %416 = arith.cmpi ne, %415, %c0_i32_188 : i32
    scf.if %416 {
      %c0_189 = arith.constant 0 : index
      %c0_190 = arith.constant 0 : index
      %417 = vector.load %arg8[%c0_189, %c0_190] : memref<8x1xf32, #tpu.memory_space<vmem>>, vector<8x1xf32>
      %c0_191 = arith.constant 0 : index
      %c0_192 = arith.constant 0 : index
      %418 = vector.load %arg9[%c0_191, %c0_192] : memref<8x1xf32, #tpu.memory_space<vmem>>, vector<8x1xf32>
      %cst_193 = arith.constant 0.000000e+00 : f32
      %419 = vector.broadcast %cst_193 : f32 to vector<8x1xf32>
      %420 = arith.maximumf %417, %419 : vector<8x1xf32>
      %cst_194 = arith.constant 0.000000e+00 : f32
      %421 = vector.broadcast %cst_194 : f32 to vector<8x1xf32>
      %422 = arith.subf %421, %420 : vector<8x1xf32>
      %423 = math.exp %422 : vector<8x1xf32>
      %cst_195 = arith.constant 8.000000e+00 : f32
      %424 = vector.broadcast %cst_195 : f32 to vector<8x1xf32>
      %425 = arith.mulf %424, %423 : vector<8x1xf32>
      %426 = arith.subf %417, %420 : vector<8x1xf32>
      %427 = math.exp %426 : vector<8x1xf32>
      %428 = arith.mulf %418, %427 : vector<8x1xf32>
      %429 = arith.addf %425, %428 : vector<8x1xf32>
      %430 = math.log %429 : vector<8x1xf32>
      %431 = arith.addf %420, %430 : vector<8x1xf32>
      %c0_196 = arith.constant 0 : index
      %c0_197 = arith.constant 0 : index
      %432 = vector.load %arg7[%c0_196, %c0_197] : memref<8x1xf32, #tpu.memory_space<vmem>>, vector<8x1xf32>
      tpu.vector_store %arg7[%c0_196, %c0_197], %431 {strides = array<i32>} : memref<8x1xf32, #tpu.memory_space<vmem>>, vector<8x1xf32>,
    } else {
    }
    return
  }
  func.func @transform_0(%arg0: i32, %arg1: i32) -> (i32, i32) {
    %c0_i32 = arith.constant 0 : i32
    %c0_i32_0 = arith.constant 0 : i32
    return %c0_i32, %arg1 : i32, i32
  }
  func.func @transform_1(%arg0: i32, %arg1: i32) -> (i32, i32) {
    %c0_i32 = arith.constant 0 : i32
    %c0_i32_0 = arith.constant 0 : i32
    return %arg0, %c0_i32 : i32, i32
  }
  func.func @transform_2(%arg0: i32, %arg1: i32) -> i32 {
    %c0_i32 = arith.constant 0 : i32
    %c0_i32_0 = arith.constant 0 : i32
    return %c0_i32 : i32
  }
  func.func @transform_3(%arg0: i32, %arg1: i32) -> i32 {
    %c0_i32 = arith.constant 0 : i32
    %c0_i32_0 = arith.constant 0 : i32
    return %c0_i32 : i32
  }
  func.func @transform_4(%arg0: i32, %arg1: i32) -> (i32, i32) {
    %c0_i32 = arith.constant 0 : i32
    %c0_i32_0 = arith.constant 0 : i32
    return %arg0, %c0_i32 : i32, i32
  }
  func.func @transform_5(%arg0: i32, %arg1: i32) -> (i32, i32) {
    %c0_i32 = arith.constant 0 : i32
    %c0_i32_0 = arith.constant 0 : i32
    return %arg0, %c0_i32 : i32, i32
  }
}

</mosaic_0001>

<llo_original>
// kernel: tpu_custom_call.1
$region0: #{tpu_custom_call.1}
  #allocation0 [shape = 'u32[]', space=smem, size = 0x4, offset = 0x4, fixed_abs, tag = 'smem constant byte address 0x4 - core index']
  #allocation1 [shape = 'u32[144,128]{1,0:T(1,128)}', space=vmem, size = 0x12000, scoped, tag = 'internal scratch']
  #allocation2 [shape = 'f32[8,1]{1,0:T(8,128)}', space=vmem, size = 0x1000, scoped, tag = 'scratch operand']
  #allocation3 [shape = 'f32[8,1]{1,0:T(8,128)}', space=vmem, size = 0x1000, scoped, tag = 'scratch operand']
  #allocation4 [shape = 'f32[1]{0:T(128)S(6)}', space=smem, size = 0x200, scoped, tag = 'scoped memory for tpu_custom_call.1']
  %s0 = inlined_call_operand.vmem [shape: f32[32,8], index: 0, kind: input, shape index: {}]
  %s1 = inlined_call_operand.vmem [shape: f32[8,32], index: 1, kind: input, shape index: {}]
  %s2 = inlined_call_operand.vmem [shape: f32[32], index: 2, kind: input, shape index: {}]
  %s3 = inlined_call_operand.<no memory space> [shape: f32[1], index: 3, kind: input, shape index: {}]
  %s4 = inlined_call_operand.vmem [shape: f32[8,1], index: 4, kind: output, shape index: {0}]
  %s5 = inlined_call_operand.vmem [shape: f32[8,1], index: 5, kind: output, shape index: {1}]
  %6 = xla_tuple %s4, %s5
  %s7 = sld [smem:[#allocation0]]
  $region46: #{tpu_custom_call.1} parent=0
    _
  %s9 = ssub.s32 1, %s7
  %s10 = scalar_select 0, %s9, %s7
  %11 = sst [smem:[#allocation4]] %s3
  $region1: #{tpu_custom_call.1} parent=0
    #allocation5 [shape = 'u8[512]{0}', space=smem, size = 0x200, scoped, tag = 'input window, operand 2, single buffered']
    #allocation6 [shape = 's32[1]{0}', space=sflag, size = 0x4, scoped, tag = 'scoped memory for tpu_custom_call.1']
    %12 = vsyncpa [#allocation6], 0
    // Predicated region
    $region2: #{tpu_custom_call.1} parent=1 // pred_check
      _
    $region3: #{tpu_custom_call.1} parent=1 // pred_check_branch
      %14 = sbr.rel (0) target = $region5
    $region4: #{tpu_custom_call.1} parent=1 // pred_region
      _
    $region5: #{tpu_custom_call.1} parent=1 // pred_fallthru
      _
    // Predicated region
    $region6: #{tpu_custom_call.1} parent=1 // pred_check
      _
    $region7: #{tpu_custom_call.1} parent=1 // pred_check_branch
      %16 = sbr.rel (0) target = $region9
    $region8: #{tpu_custom_call.1} parent=1 // pred_region
      _
    $region9: #{tpu_custom_call.1} parent=1 // pred_fallthru
      _
    // Predicated region
    $region10: #{tpu_custom_call.1} parent=1 // pred_check
      _
    $region11: #{tpu_custom_call.1} parent=1 // pred_check_branch
      %18 = sbr.rel (0) target = $region13
    $region12: #{tpu_custom_call.1} parent=1 // pred_region
      %s20 = ssub.s32 16, 16
      %21 = vsyncadd [#allocation6], %s20
      %s23 = sshll.u32 %s2, 4
      %s24 = int_to_ptr.vmem [resolvable:$true] %s23
      %26 = dma.vmem_to_smem %s24, 16, [#allocation5], [#allocation6]
    $region13: #{tpu_custom_call.1} parent=1 // pred_fallthru
      _
    // Predicated region
    $region14: #{tpu_custom_call.1} parent=1 // pred_check
      _
    $region15: #{tpu_custom_call.1} parent=1 // pred_check_branch
      %28 = sbr.rel (0) target = $region17
    $region16: #{tpu_custom_call.1} parent=1 // pred_region
      _
    $region17: #{tpu_custom_call.1} parent=1 // pred_fallthru
      _
    // Predicated region
    $region18: #{tpu_custom_call.1} parent=1 // pred_check
      _
    $region19: #{tpu_custom_call.1} parent=1 // pred_check_branch
      %30 = sbr.rel (0) target = $region21
    $region20: #{tpu_custom_call.1} parent=1 // pred_region
      %31 = dma.done [#allocation6], 16
    $region21: #{tpu_custom_call.1} parent=1 // pred_fallthru
      _
    %32 = sfence
    %p33 = scmp.eq.s32.totalorder 0, 0
    // Predicated region
    $region22: #{tpu_custom_call.1} parent=1 // pred_check
      %p34 = pneg %p33
    $region23: #{tpu_custom_call.1} parent=1 // pred_check_branch
      %36 = sbr.rel (%p34) target = $region25
    $region24: #{tpu_custom_call.1} parent=1 // pred_region
      %vm37 = vcmask 7168
      %38 = vst.msk [vmem:[#allocation2] sm:$0xff] %vm37, -1e+30
      %39 = vst.msk [vmem:[#allocation3] sm:$0xff] %vm37, 0.0
      %40 = vst.msk [vmem:[%s4] sm:$0xff] %vm37, 0.0
    $region25: #{tpu_custom_call.1} parent=1 // pred_fallthru
      _
    %v41 = vld [vmem:[%s0] sm:$0x1]
    %v42 = vld [vmem:[%s1] sm:$0xff]
    %v43 = vlaneseq
    %v44 = vshrl.u32 %v43, 7
    %v45 = vsub.s32 0, %v44
    %v46 = vrot.slane %v41, %v45
    %48 = vset.pattern.permute.xlu0 0
    %49 = vperm.xlu0 %48, %v42
    %v50 = vpop.permute.xlu0 %49
    %v52 = vadd.f32 %v46, %v50
    %v53 = vmax.f32 %v52, 0.0
    %s54 = sld [smem:[#allocation5]]
    %v55 = vstv %s54
    %v56 = vmul.f32 %v53, %v55
    %v57 = vadd.f32 %v56, 0.0
    %v58 = vld [vmem:[%s0 + $0x1] sm:$0x1]
    %v59 = vlaneseq
    %v60 = vshrl.u32 %v59, 7
    %v61 = vsub.s32 0, %v60
    %v62 = vrot.slane %v58, %v61
    %63 = vset.pattern.permute.xlu0 1
    %64 = vperm.xlu0 %63, %v42
    %v65 = vpop.permute.xlu0 %64
    %v67 = vadd.f32 %v62, %v65
    %v68 = vmax.f32 %v67, 0.0
    %s69 = sld [smem:[#allocation5 + $0x1]]
    %v70 = vstv %s69
    %v71 = vmul.f32 %v68, %v70
    %v72 = vadd.f32 %v57, %v71
    %v73 = vld [vmem:[%s0 + $0x2] sm:$0x1]
    %v74 = vlaneseq
    %v75 = vshrl.u32 %v74, 7
    %v76 = vsub.s32 0, %v75
    %v77 = vrot.slane %v73, %v76
    %78 = vset.pattern.permute.xlu0 2
    %79 = vperm.xlu0 %78, %v42
    %v80 = vpop.permute.xlu0 %79
    %v82 = vadd.f32 %v77, %v80
    %v83 = vmax.f32 %v82, 0.0
    %s84 = sld [smem:[#allocation5 + $0x2]]
    %v85 = vstv %s84
    %v86 = vmul.f32 %v83, %v85
    %v87 = vadd.f32 %v72, %v86
    %v88 = vld [vmem:[%s0 + $0x3] sm:$0x1]
    %v89 = vlaneseq
    %v90 = vshrl.u32 %v89, 7
    %v91 = vsub.s32 0, %v90
    %v92 = vrot.slane %v88, %v91
    %93 = vset.pattern.permute.xlu0 3
    %94 = vperm.xlu0 %93, %v42
    %v95 = vpop.permute.xlu0 %94
    %v97 = vadd.f32 %v92, %v95
    %v98 = vmax.f32 %v97, 0.0
    %s99 = sld [smem:[#allocation5 + $0x3]]
    %v100 = vstv %s99
    %v101 = vmul.f32 %v98, %v100
    %v102 = vadd.f32 %v87, %v101
    %v103 = vld [vmem:[%s0 + $0x4] sm:$0x1]
    %v104 = vlaneseq
    %v105 = vshrl.u32 %v104, 7
    %v106 = vsub.s32 0, %v105
    %v107 = vrot.slane %v103, %v106
    %108 = vset.pattern.permute.xlu0 4
    %109 = vperm.xlu0 %108, %v42
    %v110 = vpop.permute.xlu0 %109
    %v112 = vadd.f32 %v107, %v110
    %v113 = vmax.f32 %v112, 0.0
    %s114 = sld [smem:[#allocation5 + $0x4]]
    %v115 = vstv %s114
    %v116 = vmul.f32 %v113, %v115
    %v117 = vadd.f32 %v102, %v116
    %v118 = vld [vmem:[%s0 + $0x5] sm:$0x1]
    %v119 = vlaneseq
    %v120 = vshrl.u32 %v119, 7
    %v121 = vsub.s32 0, %v120
    %v122 = vrot.slane %v118, %v121
    %123 = vset.pattern.permute.xlu0 5
    %124 = vperm.xlu0 %123, %v42
    %v125 = vpop.permute.xlu0 %124
    %v127 = vadd.f32 %v122, %v125
    %v128 = vmax.f32 %v127, 0.0
    %s129 = sld [smem:[#allocation5 + $0x5]]
    %v130 = vstv %s129
    %v131 = vmul.f32 %v128, %v130
    %v132 = vadd.f32 %v117, %v131
    %v133 = vld [vmem:[%s0 + $0x6] sm:$0x1]
    %v134 = vlaneseq
    %v135 = vshrl.u32 %v134, 7
    %v136 = vsub.s32 0, %v135
    %v137 = vrot.slane %v133, %v136
    %138 = vset.pattern.permute.xlu0 6
    %139 = vperm.xlu0 %138, %v42
    %v140 = vpop.permute.xlu0 %139
    %v142 = vadd.f32 %v137, %v140
    %v143 = vmax.f32 %v142, 0.0
    %s144 = sld [smem:[#allocation5 + $0x6]]
    %v145 = vstv %s144
    %v146 = vmul.f32 %v143, %v145
    %v147 = vadd.f32 %v132, %v146
    %v148 = vld [vmem:[%s0 + $0x7] sm:$0x1]
    %v149 = vlaneseq
    %v150 = vshrl.u32 %v149, 7
    %v151 = vsub.s32 0, %v150
    %v152 = vrot.slane %v148, %v151
    %153 = vset.pattern.permute.xlu0 7
    %154 = vperm.xlu0 %153, %v42
    %v155 = vpop.permute.xlu0 %154
    %v157 = vadd.f32 %v152, %v155
    %v158 = vmax.f32 %v157, 0.0
    %s159 = sld [smem:[#allocation5 + $0x7]]
    %v160 = vstv %s159
    %v161 = vmul.f32 %v158, %v160
    %v162 = vadd.f32 %v147, %v161
    %v163 = vld [vmem:[%s0 + $0x8] sm:$0x1]
    %v164 = vlaneseq
    %v165 = vshrl.u32 %v164, 7
    %v166 = vsub.s32 0, %v165
    %v167 = vrot.slane %v163, %v166
    %168 = vset.pattern.permute.xlu0 8
    %169 = vperm.xlu0 %168, %v42
    %v170 = vpop.permute.xlu0 %169
    %v172 = vadd.f32 %v167, %v170
    %v173 = vmax.f32 %v172, 0.0
    %s174 = sld [smem:[#allocation5 + $0x8]]
    %v175 = vstv %s174
    %v176 = vmul.f32 %v173, %v175
    %v177 = vadd.f32 %v162, %v176
    %v178 = vld [vmem:[%s0 + $0x9] sm:$0x1]
    %v179 = vlaneseq
    %v180 = vshrl.u32 %v179, 7
    %v181 = vsub.s32 0, %v180
    %v182 = vrot.slane %v178, %v181
    %183 = vset.pattern.permute.xlu0 9
    %184 = vperm.xlu0 %183, %v42
    %v185 = vpop.permute.xlu0 %184
    %v187 = vadd.f32 %v182, %v185
    %v188 = vmax.f32 %v187, 0.0
    %s189 = sld [smem:[#allocation5 + $0x9]]
    %v190 = vstv %s189
    %v191 = vmul.f32 %v188, %v190
    %v192 = vadd.f32 %v177, %v191
    %v193 = vld [vmem:[%s0 + $0xa] sm:$0x1]
    %v194 = vlaneseq
    %v195 = vshrl.u32 %v194, 7
    %v196 = vsub.s32 0, %v195
    %v197 = vrot.slane %v193, %v196
    %198 = vset.pattern.permute.xlu0 10
    %199 = vperm.xlu0 %198, %v42
    %v200 = vpop.permute.xlu0 %199
    %v202 = vadd.f32 %v197, %v200
    %v203 = vmax.f32 %v202, 0.0
    %s204 = sld [smem:[#allocation5 + $0xa]]
    %v205 = vstv %s204
    %v206 = vmul.f32 %v203, %v205
    %v207 = vadd.f32 %v192, %v206
    %v208 = vld [vmem:[%s0 + $0xb] sm:$0x1]
    %v209 = vlaneseq
    %v210 = vshrl.u32 %v209, 7
    %v211 = vsub.s32 0, %v210
    %v212 = vrot.slane %v208, %v211
    %213 = vset.pattern.permute.xlu0 11
    %214 = vperm.xlu0 %213, %v42
    %v215 = vpop.permute.xlu0 %214
    %v217 = vadd.f32 %v212, %v215
    %v218 = vmax.f32 %v217, 0.0
    %s219 = sld [smem:[#allocation5 + $0xb]]
    %v220 = vstv %s219
    %v221 = vmul.f32 %v218, %v220
    %v222 = vadd.f32 %v207, %v221
    %v223 = vld [vmem:[%s0 + $0xc] sm:$0x1]
    %v224 = vlaneseq
    %v225 = vshrl.u32 %v224, 7
    %v226 = vsub.s32 0, %v225
    %v227 = vrot.slane %v223, %v226
    %228 = vset.pattern.permute.xlu0 12
    %229 = vperm.xlu0 %228, %v42
    %v230 = vpop.permute.xlu0 %229
    %v232 = vadd.f32 %v227, %v230
    %v233 = vmax.f32 %v232, 0.0
    %s234 = sld [smem:[#allocation5 + $0xc]]
    %v235 = vstv %s234
    %v236 = vmul.f32 %v233, %v235
    %v237 = vadd.f32 %v222, %v236
    %v238 = vld [vmem:[%s0 + $0xd] sm:$0x1]
    %v239 = vlaneseq
    %v240 = vshrl.u32 %v239, 7
    %v241 = vsub.s32 0, %v240
    %v242 = vrot.slane %v238, %v241
    %243 = vset.pattern.permute.xlu0 13
    %244 = vperm.xlu0 %243, %v42
    %v245 = vpop.permute.xlu0 %244
    %v247 = vadd.f32 %v242, %v245
    %v248 = vmax.f32 %v247, 0.0
    %s249 = sld [smem:[#allocation5 + $0xd]]
    %v250 = vstv %s249
    %v251 = vmul.f32 %v248, %v250
    %v252 = vadd.f32 %v237, %v251
    %v253 = vld [vmem:[%s0 + $0xe] sm:$0x1]
    %v254 = vlaneseq
    %v255 = vshrl.u32 %v254, 7
    %v256 = vsub.s32 0, %v255
    %v257 = vrot.slane %v253, %v256
    %258 = vset.pattern.permute.xlu0 14
    %259 = vperm.xlu0 %258, %v42
    %v260 = vpop.permute.xlu0 %259
    %v262 = vadd.f32 %v257, %v260
    %v263 = vmax.f32 %v262, 0.0
    %s264 = sld [smem:[#allocation5 + $0xe]]
    %v265 = vstv %s264
    %v266 = vmul.f32 %v263, %v265
    %v267 = vadd.f32 %v252, %v266
    %v268 = vld [vmem:[%s0 + $0xf] sm:$0x1]
    %v269 = vlaneseq
    %v270 = vshrl.u32 %v269, 7
    %v271 = vsub.s32 0, %v270
    %v272 = vrot.slane %v268, %v271
    %273 = vset.pattern.permute.xlu0 15
    %274 = vperm.xlu0 %273, %v42
    %v275 = vpop.permute.xlu0 %274
    %v277 = vadd.f32 %v272, %v275
    %v278 = vmax.f32 %v277, 0.0
    %s279 = sld [smem:[#allocation5 + $0xf]]
    %v280 = vstv %s279
    %v281 = vmul.f32 %v278, %v280
    %v282 = vadd.f32 %v267, %v281
    %v283 = vld [vmem:[%s0 + $0x10] sm:$0x1]
    %v284 = vlaneseq
    %v285 = vshrl.u32 %v284, 7
    %v286 = vsub.s32 0, %v285
    %v287 = vrot.slane %v283, %v286
    %288 = vset.pattern.permute.xlu0 16
    %289 = vperm.xlu0 %288, %v42
    %v290 = vpop.permute.xlu0 %289
    %v292 = vadd.f32 %v287, %v290
    %v293 = vmax.f32 %v292, 0.0
    %s294 = sld [smem:[#allocation5 + $0x10]]
    %v295 = vstv %s294
    %v296 = vmul.f32 %v293, %v295
    %v297 = vadd.f32 %v282, %v296
    %v298 = vld [vmem:[%s0 + $0x11] sm:$0x1]
    %v299 = vlaneseq
    %v300 = vshrl.u32 %v299, 7
    %v301 = vsub.s32 0, %v300
    %v302 = vrot.slane %v298, %v301
    %303 = vset.pattern.permute.xlu0 17
    %304 = vperm.xlu0 %303, %v42
    %v305 = vpop.permute.xlu0 %304
    %v307 = vadd.f32 %v302, %v305
    %v308 = vmax.f32 %v307, 0.0
    %s309 = sld [smem:[#allocation5 + $0x11]]
    %v310 = vstv %s309
    %v311 = vmul.f32 %v308, %v310
    %v312 = vadd.f32 %v297, %v311
    %v313 = vld [vmem:[%s0 + $0x12] sm:$0x1]
    %v314 = vlaneseq
    %v315 = vshrl.u32 %v314, 7
    %v316 = vsub.s32 0, %v315
    %v317 = vrot.slane %v313, %v316
    %318 = vset.pattern.permute.xlu0 18
    %319 = vperm.xlu0 %318, %v42
    %v320 = vpop.permute.xlu0 %319
    %v322 = vadd.f32 %v317, %v320
    %v323 = vmax.f32 %v322, 0.0
    %s324 = sld [smem:[#allocation5 + $0x12]]
    %v325 = vstv %s324
    %v326 = vmul.f32 %v323, %v325
    %v327 = vadd.f32 %v312, %v326
    %v328 = vld [vmem:[%s0 + $0x13] sm:$0x1]
    %v329 = vlaneseq
    %v330 = vshrl.u32 %v329, 7
    %v331 = vsub.s32 0, %v330
    %v332 = vrot.slane %v328, %v331
    %333 = vset.pattern.permute.xlu0 19
    %334 = vperm.xlu0 %333, %v42
    %v335 = vpop.permute.xlu0 %334
    %v337 = vadd.f32 %v332, %v335
    %v338 = vmax.f32 %v337, 0.0
    %s339 = sld [smem:[#allocation5 + $0x13]]
    %v340 = vstv %s339
    %v341 = vmul.f32 %v338, %v340
    %v342 = vadd.f32 %v327, %v341
    %v343 = vld [vmem:[%s0 + $0x14] sm:$0x1]
    %v344 = vlaneseq
    %v345 = vshrl.u32 %v344, 7
    %v346 = vsub.s32 0, %v345
    %v347 = vrot.slane %v343, %v346
    %348 = vset.pattern.permute.xlu0 20
    %349 = vperm.xlu0 %348, %v42
    %v350 = vpop.permute.xlu0 %349
    %v352 = vadd.f32 %v347, %v350
    %v353 = vmax.f32 %v352, 0.0
    %s354 = sld [smem:[#allocation5 + $0x14]]
    %v355 = vstv %s354
    %v356 = vmul.f32 %v353, %v355
    %v357 = vadd.f32 %v342, %v356
    %v358 = vld [vmem:[%s0 + $0x15] sm:$0x1]
    %v359 = vlaneseq
    %v360 = vshrl.u32 %v359, 7
    %v361 = vsub.s32 0, %v360
    %v362 = vrot.slane %v358, %v361
    %363 = vset.pattern.permute.xlu0 21
    %364 = vperm.xlu0 %363, %v42
    %v365 = vpop.permute.xlu0 %364
    %v367 = vadd.f32 %v362, %v365
    %v368 = vmax.f32 %v367, 0.0
    %s369 = sld [smem:[#allocation5 + $0x15]]
    %v370 = vstv %s369
    %v371 = vmul.f32 %v368, %v370
    %v372 = vadd.f32 %v357, %v371
    %v373 = vld [vmem:[%s0 + $0x16] sm:$0x1]
    %v374 = vlaneseq
    %v375 = vshrl.u32 %v374, 7
    %v376 = vsub.s32 0, %v375
    %v377 = vrot.slane %v373, %v376
    %378 = vset.pattern.permute.xlu0 22
    %379 = vperm.xlu0 %378, %v42
    %v380 = vpop.permute.xlu0 %379
    %v382 = vadd.f32 %v377, %v380
    %v383 = vmax.f32 %v382, 0.0
    %s384 = sld [smem:[#allocation5 + $0x16]]
    %v385 = vstv %s384
    %v386 = vmul.f32 %v383, %v385
    %v387 = vadd.f32 %v372, %v386
    %v388 = vld [vmem:[%s0 + $0x17] sm:$0x1]
    %v389 = vlaneseq
    %v390 = vshrl.u32 %v389, 7
    %v391 = vsub.s32 0, %v390
    %v392 = vrot.slane %v388, %v391
    %393 = vset.pattern.permute.xlu0 23
    %394 = vperm.xlu0 %393, %v42
    %v395 = vpop.permute.xlu0 %394
    %v397 = vadd.f32 %v392, %v395
    %v398 = vmax.f32 %v397, 0.0
    %s399 = sld [smem:[#allocation5 + $0x17]]
    %v400 = vstv %s399
    %v401 = vmul.f32 %v398, %v400
    %v402 = vadd.f32 %v387, %v401
    %v403 = vld [vmem:[%s0 + $0x18] sm:$0x1]
    %v404 = vlaneseq
    %v405 = vshrl.u32 %v404, 7
    %v406 = vsub.s32 0, %v405
    %v407 = vrot.slane %v403, %v406
    %408 = vset.pattern.permute.xlu0 24
    %409 = vperm.xlu0 %408, %v42
    %v410 = vpop.permute.xlu0 %409
    %v412 = vadd.f32 %v407, %v410
    %v413 = vmax.f32 %v412, 0.0
    %s414 = sld [smem:[#allocation5 + $0x18]]
    %v415 = vstv %s414
    %v416 = vmul.f32 %v413, %v415
    %v417 = vadd.f32 %v402, %v416
    %v418 = vld [vmem:[%s0 + $0x19] sm:$0x1]
    %v419 = vlaneseq
    %v420 = vshrl.u32 %v419, 7
    %v421 = vsub.s32 0, %v420
    %v422 = vrot.slane %v418, %v421
    %423 = vset.pattern.permute.xlu0 25
    %424 = vperm.xlu0 %423, %v42
    %v425 = vpop.permute.xlu0 %424
    %v427 = vadd.f32 %v422, %v425
    %v428 = vmax.f32 %v427, 0.0
    %s429 = sld [smem:[#allocation5 + $0x19]]
    %v430 = vstv %s429
    %v431 = vmul.f32 %v428, %v430
    %v432 = vadd.f32 %v417, %v431
    %v433 = vld [vmem:[%s0 + $0x1a] sm:$0x1]
    %v434 = vlaneseq
    %v435 = vshrl.u32 %v434, 7
    %v436 = vsub.s32 0, %v435
    %v437 = vrot.slane %v433, %v436
    %438 = vset.pattern.permute.xlu0 26
    %439 = vperm.xlu0 %438, %v42
    %v440 = vpop.permute.xlu0 %439
    %v442 = vadd.f32 %v437, %v440
    %v443 = vmax.f32 %v442, 0.0
    %s444 = sld [smem:[#allocation5 + $0x1a]]
    %v445 = vstv %s444
    %v446 = vmul.f32 %v443, %v445
    %v447 = vadd.f32 %v432, %v446
    %v448 = vld [vmem:[%s0 + $0x1b] sm:$0x1]
    %v449 = vlaneseq
    %v450 = vshrl.u32 %v449, 7
    %v451 = vsub.s32 0, %v450
    %v452 = vrot.slane %v448, %v451
    %453 = vset.pattern.permute.xlu0 27
    %454 = vperm.xlu0 %453, %v42
    %v455 = vpop.permute.xlu0 %454
    %v457 = vadd.f32 %v452, %v455
    %v458 = vmax.f32 %v457, 0.0
    %s459 = sld [smem:[#allocation5 + $0x1b]]
    %v460 = vstv %s459
    %v461 = vmul.f32 %v458, %v460
    %v462 = vadd.f32 %v447, %v461
    %v463 = vld [vmem:[%s0 + $0x1c] sm:$0x1]
    %v464 = vlaneseq
    %v465 = vshrl.u32 %v464, 7
    %v466 = vsub.s32 0, %v465
    %v467 = vrot.slane %v463, %v466
    %468 = vset.pattern.permute.xlu0 28
    %469 = vperm.xlu0 %468, %v42
    %v470 = vpop.permute.xlu0 %469
    %v472 = vadd.f32 %v467, %v470
    %v473 = vmax.f32 %v472, 0.0
    %s474 = sld [smem:[#allocation5 + $0x1c]]
    %v475 = vstv %s474
    %v476 = vmul.f32 %v473, %v475
    %v477 = vadd.f32 %v462, %v476
    %v478 = vld [vmem:[%s0 + $0x1d] sm:$0x1]
    %v479 = vlaneseq
    %v480 = vshrl.u32 %v479, 7
    %v481 = vsub.s32 0, %v480
    %v482 = vrot.slane %v478, %v481
    %483 = vset.pattern.permute.xlu0 29
    %484 = vperm.xlu0 %483, %v42
    %v485 = vpop.permute.xlu0 %484
    %v487 = vadd.f32 %v482, %v485
    %v488 = vmax.f32 %v487, 0.0
    %s489 = sld [smem:[#allocation5 + $0x1d]]
    %v490 = vstv %s489
    %v491 = vmul.f32 %v488, %v490
    %v492 = vadd.f32 %v477, %v491
    %v493 = vld [vmem:[%s0 + $0x1e] sm:$0x1]
    %v494 = vlaneseq
    %v495 = vshrl.u32 %v494, 7
    %v496 = vsub.s32 0, %v495
    %v497 = vrot.slane %v493, %v496
    %498 = vset.pattern.permute.xlu0 30
    %499 = vperm.xlu0 %498, %v42
    %v500 = vpop.permute.xlu0 %499
    %v502 = vadd.f32 %v497, %v500
    %v503 = vmax.f32 %v502, 0.0
    %s504 = sld [smem:[#allocation5 + $0x1e]]
    %v505 = vstv %s504
    %v506 = vmul.f32 %v503, %v505
    %v507 = vadd.f32 %v492, %v506
    %v508 = vld [vmem:[%s0 + $0x1f] sm:$0x1]
    %v509 = vlaneseq
    %v510 = vshrl.u32 %v509, 7
    %v511 = vsub.s32 0, %v510
    %v512 = vrot.slane %v508, %v511
    %513 = vset.pattern.permute.xlu0 31
    %514 = vperm.xlu0 %513, %v42
    %v515 = vpop.permute.xlu0 %514
    %v517 = vadd.f32 %v512, %v515
    %v518 = vmax.f32 %v517, 0.0
    %s519 = sld [smem:[#allocation5 + $0x1f]]
    %v520 = vstv %s519
    %v521 = vmul.f32 %v518, %v520
    %v522 = vadd.f32 %v507, %v521
    %s523 = sld [smem:[#allocation4]]
    %v524 = vstv %s523
    %v525 = vadd.f32 %v522, %v524
    %s526 = smul.u32 0, 8
    %v527 = vlaneseq
    %v528 = vshrl.u32 %v527, 7
    %v529 = vstv %s526
    %v530 = vadd.s32 %v529, %v528
    %s531 = smul.u32 0, 8
    %v532 = vlaneseq
    %v533 = vand.u32 %v532, 127
    %v534 = vstv %s531
    %v535 = vadd.s32 %v534, %v533
    %vm536 = vcmp.eq.s32.totalorder %v530, %v535
    %v537 = vsel %vm536, %v525, 0.0
    %vm538 = vcmask 64512
    %v539 = vsel %vm538, %v537, 0.0
    %540 = vadd.xlane.f32.xlu0 %v539
    %v541 = vpop.xlane.xlu0 %540
    %vm542 = vcmp.ge.s32.totalorder %v530, %v534
    %s543 = sadd.s32 0, 1
    %s544 = smul.u32 %s543, 8
    %v545 = vstv %s544
    %vm546 = vcmp.lt.s32.totalorder %v530, %v545
    %vm547 = vmand %vm542, %vm546
    %v548 = vld [vmem:[%s4] sm:$0xff]
    %v549 = vmax.f32 %v541, 0.0
    %v550 = vand.u32 2147483647, %v541
    %v551 = vsub.f32 0.0, %v550
    %v552 = vmul.f32 %v551, 1.442695
    %v553 = vpow.pop %v552
    %v554 = vadd.f32 %v553, 1.0
    %v555 = vlog2.pop %v554
    %v556 = vmul.f32 %v555, 0.6931472
    %v557 = vmul.f32 -0.5, %v553
    %v558 = vadd.f32 %v557, 1.0
    %v559 = vmul.f32 %v558, %v553
    %v560 = vand.u32 2147483647, %v553
    %vm561 = vcmp.lt.f32.partialorder %v560, 0.0004427343
    %v562 = vsel %vm561, %v559, %v556
    %v563 = vadd.f32 %v549, %v562
    %v564 = vsel %vm547, %v563, 0.0
    %v565 = vadd.f32 %v548, %v564
    %vm566 = vcmask 7168
    %567 = vst.msk [vmem:[%s4] sm:$0xff] %vm566, %v565
    %v568 = vsel %vm538, %v525, -inf
    %569 = vmax.xlane.f32.xlu0 %v568
    %v570 = vpop.xlane.xlu0 %569
    %v571 = vld [vmem:[#allocation2] sm:$0xff]
    %v572 = vmax.f32 %v571, %v570
    %v573 = vld [vmem:[#allocation3] sm:$0xff]
    %v574 = vsub.f32 %v571, %v572
    %v575 = vmul.f32 %v574, 1.442695
    %v576 = vpow.pop %v575
    %v577 = vmul.f32 %v573, %v576
    %579 = vset.pattern.permute.xlu0 0
    %580 = vperm.xlu0 %579, %v572
    %v581 = vpop.permute.xlu0 %580
    %v583 = vsub.f32 %v525, %v581
    %v584 = vmul.f32 %v583, 1.442695
    %v585 = vpow.pop %v584
    %v586 = vsel %vm538, %v585, 0.0
    %587 = vadd.xlane.f32.xlu0 %v586
    %v588 = vpop.xlane.xlu0 %587
    %v589 = vadd.f32 %v577, %v588
    %590 = vst.msk [vmem:[#allocation3] sm:$0xff] %vm566, %v589
    %591 = vst.msk [vmem:[#allocation2] sm:$0xff] %vm566, %v572
    // Predicated region
    $region26: #{tpu_custom_call.1} parent=1 // pred_check
      %p592 = pneg %p33
    $region27: #{tpu_custom_call.1} parent=1 // pred_check_branch
      %594 = sbr.rel (%p592) target = $region29
    $region28: #{tpu_custom_call.1} parent=1 // pred_region
      %v595 = vld [vmem:[#allocation2] sm:$0xff]
      %v596 = vld [vmem:[#allocation3] sm:$0xff]
      %v597 = vmax.f32 %v595, 0.0
      %v598 = vsub.f32 0.0, %v597
      %v599 = vmul.f32 %v598, 1.442695
      %v600 = vpow.pop %v599
      %v601 = vmul.f32 %v600, 8.0
      %v602 = vsub.f32 %v595, %v597
      %v603 = vmul.f32 %v602, 1.442695
      %v604 = vpow.pop %v603
      %v605 = vmul.f32 %v596, %v604
      %v606 = vadd.f32 %v601, %v605
      %v607 = vlog2.pop %v606
      %v608 = vmul.f32 %v607, 0.6931472
      %v609 = vadd.f32 %v597, %v608
      %610 = vst.msk [vmem:[%s5] sm:$0xff] %vm566, %v609
    $region29: #{tpu_custom_call.1} parent=1 // pred_fallthru
      _
    // Predicated region
    $region30: #{tpu_custom_call.1} parent=1 // pred_check
      _
    $region31: #{tpu_custom_call.1} parent=1 // pred_check_branch
      %612 = sbr.rel (0) target = $region33
    $region32: #{tpu_custom_call.1} parent=1 // pred_region
      _
    $region33: #{tpu_custom_call.1} parent=1 // pred_fallthru
      _
    // Predicated region
    $region34: #{tpu_custom_call.1} parent=1 // pred_check
      _
    $region35: #{tpu_custom_call.1} parent=1 // pred_check_branch
      %614 = sbr.rel (0) target = $region37
    $region36: #{tpu_custom_call.1} parent=1 // pred_region
      _
    $region37: #{tpu_custom_call.1} parent=1 // pred_fallthru
      _
    // Predicated region
    $region38: #{tpu_custom_call.1} parent=1 // pred_check
      _
    $region39: #{tpu_custom_call.1} parent=1 // pred_check_branch
      %616 = sbr.rel (0) target = $region41
    $region40: #{tpu_custom_call.1} parent=1 // pred_region
      _
    $region41: #{tpu_custom_call.1} parent=1 // pred_fallthru
      _
    // Predicated region
    $region42: #{tpu_custom_call.1} parent=1 // pred_check
      _
    $region43: #{tpu_custom_call.1} parent=1 // pred_check_branch
      %618 = sbr.rel (0) target = $region45
    $region44: #{tpu_custom_call.1} parent=1 // pred_region
      _
    $region45: #{tpu_custom_call.1} parent=1 // pred_fallthru
      _
    %619 = vsyncpa [#allocation6], 1

</llo_original>
